<compile_context>
chip_gen: v7x
topology: tpu7x:2x2x1
jax: 0.10.0
libtpu: 0.0.40
codegen_flags: <defaults>
</compile_context>

<pallas_src>
import jax
import jax.numpy as jnp
from jax.experimental import pallas as pl
from jax.experimental.pallas import tpu as pltpu


def _round_up(x, m):
    return ((x + m - 1) // m) * m


def _vmem_budget_bytes():
    """Generation-aware VMEM budget (v7x: 64 MiB physical, v5e/v6e: 128 MiB)."""
    try:
        cap = int(getattr(pltpu.get_tpu_info(), "vmem_capacity_bytes", 64 << 20))
    except Exception:
        cap = 64 << 20  # conservative (v7x-sized) fallback
    return max(16 << 20, int(cap * 0.6))


def _divisor_tile(m_blocks, cap_blocks):
    """Largest multiple of 128 that divides m_blocks*128 and is <= cap_blocks*128."""
    best = 1
    for d in range(1, max(1, min(m_blocks, cap_blocks)) + 1):
        if m_blocks % d == 0:
            best = d
    return best * 128


def _fused_stage1_kernel(phi_inv_ref, feat_ref, w_ref, scale_ref, o_ref, acc_ref):
    """o[i_tile] = scale[i_tile] * sum_k phi_inv[i_tile, k_tile] @ (feat[k_tile] @ W)."""
    k = pl.program_id(1)

    @pl.when(k == 0)
    def _init():
        acc_ref[...] = jnp.zeros_like(acc_ref)

    # Produce the "filtered features" K-tile in-kernel (W is VMEM-resident).
    filtered = jnp.dot(feat_ref[...], w_ref[...],
                       preferred_element_type=jnp.float32)
    acc_ref[...] += jnp.dot(phi_inv_ref[...],
                            filtered.astype(phi_inv_ref.dtype),
                            preferred_element_type=jnp.float32)

    @pl.when(k == pl.num_programs(1) - 1)
    def _finalize():
        o_ref[...] = (scale_ref[...] * acc_ref[...]).astype(o_ref.dtype)


def _make_matmul_kernel(tk, b_resident):
    """o = A @ B with f32 accumulation; B either streamed per-K-tile or VMEM-resident."""

    def kernel(a_ref, b_ref, o_ref, acc_ref):
        k = pl.program_id(1)

        @pl.when(k == 0)
        def _init():
            acc_ref[...] = jnp.zeros_like(acc_ref)

        if b_resident:
            start = pl.multiple_of(k * tk, 128)
            b_tile = b_ref[pl.ds(start, tk), :]
        else:
            b_tile = b_ref[...]
        acc_ref[...] += jnp.dot(a_ref[...], b_tile,
                                preferred_element_type=jnp.float32)

        @pl.when(k == pl.num_programs(1) - 1)
        def _finalize():
            o_ref[...] = acc_ref[...].astype(o_ref.dtype)

    return kernel


def hgnn_layer_forward(phi_indices, phi_values,
                       phi_inverse_indices, phi_inverse_values,
                       features, weight_matrix, diagonal_weight_filter,
                       ncount, *, compute_dtype=jnp.bfloat16):
    """Dense-equivalent HGNN_layer.forward (dropout=None path).

    compute_dtype controls the phi / phi_inv / features / W operand dtype
    (accumulation is always f32, final output is f32). bf16 is the default since
    the kernels are HBM-bound on the two (n, n) operator streams.
    """
    n = int(ncount)
    in_ch = features.shape[1]
    out_ch = weight_matrix.shape[1]

    # ---- glue: densify COO sparse operands (spspmm/spmm -> dense matmuls) ----
    # TODO(synk): a CSR + PrefetchScalarGridSpec row-gather path would avoid
    # materializing two dense (n, n) arrays for genuinely sparse graphs.
    phi = jnp.zeros((n, n), jnp.float32).at[
        phi_indices[0], phi_indices[1]].add(phi_values.astype(jnp.float32))
    phi_inv = jnp.zeros((n, n), jnp.float32).at[
        phi_inverse_indices[0], phi_inverse_indices[1]].add(
            phi_inverse_values.astype(jnp.float32))

    # ---- padding: everything lane/sublane aligned ----
    n_pad = _round_up(n, 128)
    in_pad = _round_up(in_ch, 128)
    out_pad = _round_up(out_ch, 128)

    a_it = jnp.dtype(compute_dtype).itemsize
    o1_it = a_it  # stage-1 output ('t') dtype == compute_dtype

    # ---- tile selection (divisors of n_pad, no extra padding waste) ----
    m_blocks = n_pad // 128
    tm_cap = min(4, m_blocks // 2) if m_blocks >= 2 else 1  # <=512, keep >=2 row blocks
    tm = _divisor_tile(m_blocks, tm_cap)
    tk = _divisor_tile(m_blocks, 8)                          # <=1024 K tile

    budget = _vmem_budget_bytes()

    # Keep `t` (stage-2 B operand) fully VMEM-resident when it is small enough
    # (it is only n_pad * out_pad * itemsize; budget 2 buffers to be safe).
    b_res_bytes = 2 * n_pad * out_pad * o1_it
    b_resident = b_res_bytes <= min(16 << 20, budget // 3)

    def ws_stage1(tm_, tk_):
        return (2 * tm_ * tk_ * a_it            # phi_inv tiles (double buffered)
                + 2 * tk_ * in_pad * a_it       # feature K tiles
                + 2 * in_pad * out_pad * a_it   # resident W
                + 2 * tm_ * 128 * 4             # d column (lane padded)
                + tm_ * out_pad * 4             # f32 accumulator
                + 2 * tm_ * out_pad * o1_it)    # output tiles

    def ws_stage2(tm_, tk_):
        b_bytes = b_res_bytes if b_resident else 2 * tk_ * out_pad * o1_it
        return (2 * tm_ * tk_ * a_it + b_bytes
                + tm_ * out_pad * 4 + 2 * tm_ * out_pad * 4)

    while max(ws_stage1(tm, tk), ws_stage2(tm, tk)) > budget and tk > 128:
        tk = _divisor_tile(m_blocks, tk // 128 - 1)
    while max(ws_stage1(tm, tk), ws_stage2(tm, tk)) > budget and tm > 128:
        tm = _divisor_tile(m_blocks, tm // 128 - 1)

    vmem_limit = int(min(budget,
                         max(4 << 20,
                             2 * max(ws_stage1(tm, tk), ws_stage2(tm, tk)))))

    # ---- pad operands ----
    # TODO(synk): fp8 (v7x) / int8 (v6e) phi operands with per-row scales could halve
    # the dominant stream again if the accuracy budget allows.
    phi_p = jnp.zeros((n_pad, n_pad), compute_dtype).at[:n, :n].set(
        phi.astype(compute_dtype))
    phi_inv_p = jnp.zeros((n_pad, n_pad), compute_dtype).at[:n, :n].set(
        phi_inv.astype(compute_dtype))
    feat_p = jnp.zeros((n_pad, in_pad), compute_dtype).at[:n, :in_ch].set(
        features.astype(compute_dtype))
    w_p = jnp.zeros((in_pad, out_pad), compute_dtype).at[:in_ch, :out_ch].set(
        weight_matrix.astype(compute_dtype))
    d_col = jnp.zeros((n_pad, 1), jnp.float32).at[:n, :].set(
        diagonal_weight_filter.reshape(n, 1).astype(jnp.float32))

    grid = (n_pad // tm, n_pad // tk)
    dims = ("parallel", "arbitrary")

    # Stage 1 (fused): t = d * (phi_inv @ (features @ W))
    t = pl.pallas_call(
        _fused_stage1_kernel,
        out_shape=jax.ShapeDtypeStruct((n_pad, out_pad), compute_dtype),
        grid_spec=pltpu.PrefetchScalarGridSpec(
            num_scalar_prefetch=0,
            grid=grid,
            in_specs=[
                pl.BlockSpec((tm, tk), lambda i, k: (i, k)),            # phi_inv tile
                pl.BlockSpec((tk, in_pad), lambda i, k: (k, 0)),        # features K tile
                pl.BlockSpec((in_pad, out_pad), lambda i, k: (0, 0)),   # W (resident)
                pl.BlockSpec((tm, 1), lambda i, k: (i, 0)),             # d scale
            ],
            out_specs=pl.BlockSpec((tm, out_pad), lambda i, k: (i, 0)),
            scratch_shapes=[pltpu.VMEM((tm, out_pad), jnp.float32)],
        ),
        compiler_params=pltpu.CompilerParams(
            dimension_semantics=dims, vmem_limit_bytes=vmem_limit),
    )(phi_inv_p, feat_p, w_p, d_col)

    # Stage 2: out = phi @ t   ( == (phi @ diag(d)) @ phi_inv @ (features @ W) )
    if b_resident:
        b_spec = pl.BlockSpec((n_pad, out_pad), lambda i, k: (0, 0))    # resident
    else:
        b_spec = pl.BlockSpec((tk, out_pad), lambda i, k: (k, 0))       # streamed

    out = pl.pallas_call(
        _make_matmul_kernel(tk, b_resident),
        out_shape=jax.ShapeDtypeStruct((n_pad, out_pad), jnp.float32),
        grid_spec=pltpu.PrefetchScalarGridSpec(
            num_scalar_prefetch=0,
            grid=grid,
            in_specs=[
                pl.BlockSpec((tm, tk), lambda i, k: (i, k)),            # phi tile
                b_spec,                                                 # t
            ],
            out_specs=pl.BlockSpec((tm, out_pad), lambda i, k: (i, 0)),
            scratch_shapes=[pltpu.VMEM((tm, out_pad), jnp.float32)],
        ),
        compiler_params=pltpu.CompilerParams(
            dimension_semantics=dims, vmem_limit_bytes=vmem_limit),
    )(phi_p, t)

    return out[:n, :out_ch]


def _reference(phi_indices, phi_values, phi_inverse_indices, phi_inverse_values,
               features, weight_matrix, diagonal_weight_filter, ncount):
    n = ncount
    phi = jnp.zeros((n, n), jnp.float32).at[
        phi_indices[0], phi_indices[1]].add(phi_values)
    phi_inv = jnp.zeros((n, n), jnp.float32).at[
        phi_inverse_indices[0], phi_inverse_indices[1]].add(phi_inverse_values)
    rescaled = phi @ jnp.diag(diagonal_weight_filter.reshape(-1))
    phi_product = rescaled @ phi_inv
    filtered = features @ weight_matrix
    return phi_product @ filtered


if __name__ == "__main__":
    key = jax.random.PRNGKey(0)
    ncount, in_channels, out_channels = 128, 32, 32
    nnz = 512

    k = jax.random.split(key, 8)

    # Sparse phi / phi_inverse in COO form (module's native input format).
    phi_rows = jax.random.randint(k[0], (nnz,), 0, ncount)
    phi_cols = jax.random.randint(k[1], (nnz,), 0, ncount)
    phi_indices = jnp.stack([phi_rows, phi_cols])
    phi_values = jax.random.normal(k[2], (nnz,), jnp.float32)

    pinv_rows = jax.random.randint(k[3], (nnz,), 0, ncount)
    pinv_cols = jax.random.randint(k[4], (nnz,), 0, ncount)
    phi_inverse_indices = jnp.stack([pinv_rows, pinv_cols])
    phi_inverse_values = jax.random.normal(k[5], (nnz,), jnp.float32)

    features = jax.random.normal(k[6], (ncount, in_channels), jnp.float32)

    # Parameter init matching __init__ shapes:
    #   weight_matrix: xavier_uniform (in_channels, out_channels)
    #   diagonal_weight_filter: uniform(0.9, 1.1) of shape (ncount, 1)
    kw, kd = jax.random.split(k[7])
    limit = (6.0 / (in_channels + out_channels)) ** 0.5
    weight_matrix = jax.random.uniform(
        kw, (in_channels, out_channels), jnp.float32, -limit, limit)
    diagonal_weight_filter = jax.random.uniform(
        kd, (ncount, 1), jnp.float32, 0.9, 1.1)

    ref = _reference(
        phi_indices, phi_values, phi_inverse_indices, phi_inverse_values,
        features, weight_matrix, diagonal_weight_filter, ncount)

    # f32 operand path: must match the reference tightly.
    out_f32 = hgnn_layer_forward(
        phi_indices, phi_values, phi_inverse_indices, phi_inverse_values,
        features, weight_matrix, diagonal_weight_filter, ncount,
        compute_dtype=jnp.float32)
    out_f32 = jax.block_until_ready(out_f32)
    assert out_f32.shape == (ncount, out_channels)
    assert jnp.allclose(out_f32, ref, atol=1e-3, rtol=1e-3), "f32 mismatch vs reference"

    # Default bf16 operand path (halves HBM traffic of phi/phi_inv; f32 accumulation):
    # checked at bf16-class tolerance (normalized max error).
    out_bf16 = jax.block_until_ready(hgnn_layer_forward(
        phi_indices, phi_values, phi_inverse_indices, phi_inverse_values,
        features, weight_matrix, diagonal_weight_filter, ncount))
    rel_err = jnp.max(jnp.abs(out_bf16 - ref)) / (jnp.max(jnp.abs(ref)) + 1e-6)
    assert float(rel_err) < 0.1, f"bf16 path error too large: {float(rel_err)}"

    print("KERNEL_OK")
</pallas_src>

<mosaic_0001>
module attributes {stable_mosaic.version = 11 : i64} {
  func.func @_fused_stage1_kernel(%arg0: i32, %arg1: i32, %arg2: memref<128x128xf32, #tpu.memory_space<vmem>>, %arg3: memref<128x128xf32, #tpu.memory_space<vmem>>, %arg4: memref<128x128xf32, #tpu.memory_space<vmem>>, %arg5: memref<128x1xf32, #tpu.memory_space<vmem>>, %arg6: memref<128x128xf32, #tpu.memory_space<vmem>>, %arg7: memref<128x128xf32, #tpu.memory_space<vmem>>) attributes {dimension_semantics = [#tpu.dimension_semantics<parallel>, #tpu.dimension_semantics<arbitrary>], iteration_bounds = array<i64: 1, 1>, scalar_prefetch = 0 : i64, scratch_operands = 1 : i64, tpu.core_type = #tpu.core_type<tc>, window_params = [{transform_indices = @transform_0, window_bounds = array<i64: 128, 128>}, {transform_indices = @transform_1, window_bounds = array<i64: 128, 128>}, {pipeline_mode = #tpu.pipeline_mode<synchronous>, transform_indices = @transform_2, window_bounds = array<i64: 128, 128>}, {transform_indices = @transform_3, window_bounds = array<i64: 128, 1>}, {transform_indices = @transform_4, window_bounds = array<i64: 128, 128>}]} {
    %c0_i32 = arith.constant 0 : i32
    %0 = arith.cmpi eq, %arg1, %c0_i32 : i32
    %1 = arith.extui %0 : i1 to i32
    %c0_i32_0 = arith.constant 0 : i32
    %2 = arith.cmpi ne, %1, %c0_i32_0 : i32
    scf.if %2 {
      %cst_13 = arith.constant 0.000000e+00 : f32
      %14 = vector.broadcast %cst_13 : f32 to vector<128x128xf32>
      %c0_14 = arith.constant 0 : index
      %c0_15 = arith.constant 0 : index
      %15 = vector.load %arg7[%c0_14, %c0_15] : memref<128x128xf32, #tpu.memory_space<vmem>>, vector<128x128xf32>
      tpu.vector_store %arg7[%c0_14, %c0_15], %14 {strides = array<i32>} : memref<128x128xf32, #tpu.memory_space<vmem>>, vector<128x128xf32>,
    } else {
    }
    %c0 = arith.constant 0 : index
    %c0_1 = arith.constant 0 : index
    %3 = vector.load %arg3[%c0, %c0_1] : memref<128x128xf32, #tpu.memory_space<vmem>>, vector<128x128xf32>
    %c0_2 = arith.constant 0 : index
    %c0_3 = arith.constant 0 : index
    %4 = vector.load %arg4[%c0_2, %c0_3] : memref<128x128xf32, #tpu.memory_space<vmem>>, vector<128x128xf32>
    %cst = arith.constant dense<0.000000e+00> : vector<128x128xf32>
    %5 = tpu.matmul %3, %4, %cst {dimension_numbers = #tpu.dot_dimension_numbers<[1], [0], [0], [1], [0, 0, 1, 1], [], []>} : vector<128x128xf32>, vector<128x128xf32>, vector<128x128xf32> -> vector<128x128xf32>
    %c0_4 = arith.constant 0 : index
    %c0_5 = arith.constant 0 : index
    %6 = vector.load %arg7[%c0_4, %c0_5] : memref<128x128xf32, #tpu.memory_space<vmem>>, vector<128x128xf32>
    %c0_6 = arith.constant 0 : index
    %c0_7 = arith.constant 0 : index
    %7 = vector.load %arg2[%c0_6, %c0_7] : memref<128x128xf32, #tpu.memory_space<vmem>>, vector<128x128xf32>
    %cst_8 = arith.constant dense<0.000000e+00> : vector<128x128xf32>
    %8 = tpu.matmul %7, %5, %cst_8 {dimension_numbers = #tpu.dot_dimension_numbers<[1], [0], [0], [1], [0, 0, 1, 1], [], []>} : vector<128x128xf32>, vector<128x128xf32>, vector<128x128xf32> -> vector<128x128xf32>
    %9 = arith.addf %6, %8 : vector<128x128xf32>
    %c0_9 = arith.constant 0 : index
    %c0_10 = arith.constant 0 : index
    %10 = vector.load %arg7[%c0_9, %c0_10] : memref<128x128xf32, #tpu.memory_space<vmem>>, vector<128x128xf32>
    tpu.vector_store %arg7[%c0_9, %c0_10], %9 {strides = array<i32>} : memref<128x128xf32, #tpu.memory_space<vmem>>, vector<128x128xf32>,
    %c0_i32_11 = arith.constant 0 : i32
    %11 = arith.cmpi eq, %arg1, %c0_i32_11 : i32
    %12 = arith.extui %11 : i1 to i32
    %c0_i32_12 = arith.constant 0 : i32
    %13 = arith.cmpi ne, %12, %c0_i32_12 : i32
    scf.if %13 {
      %c0_13 = arith.constant 0 : index
      %c0_14 = arith.constant 0 : index
      %14 = vector.load %arg5[%c0_13, %c0_14] : memref<128x1xf32, #tpu.memory_space<vmem>>, vector<128x1xf32>
      %c0_15 = arith.constant 0 : index
      %c0_16 = arith.constant 0 : index
      %15 = vector.load %arg7[%c0_15, %c0_16] : memref<128x128xf32, #tpu.memory_space<vmem>>, vector<128x128xf32>
      %16 = vector.broadcast %14 : vector<128x1xf32> to vector<128x128xf32>
      %17 = arith.mulf %16, %15 : vector<128x128xf32>
      %c0_17 = arith.constant 0 : index
      %c0_18 = arith.constant 0 : index
      %18 = vector.load %arg6[%c0_17, %c0_18] : memref<128x128xf32, #tpu.memory_space<vmem>>, vector<128x128xf32>
      tpu.vector_store %arg6[%c0_17, %c0_18], %17 {strides = array<i32>} : memref<128x128xf32, #tpu.memory_space<vmem>>, vector<128x128xf32>,
    } else {
    }
    return
  }
  func.func @transform_0(%arg0: i32, %arg1: i32) -> (i32, i32) {
    %c0_i32 = arith.constant 0 : i32
    return %arg0, %arg1 : i32, i32
  }
  func.func @transform_1(%arg0: i32, %arg1: i32) -> (i32, i32) {
    %c0_i32 = arith.constant 0 : i32
    %c0_i32_0 = arith.constant 0 : i32
    return %arg1, %c0_i32 : i32, i32
  }
  func.func @transform_2(%arg0: i32, %arg1: i32) -> (i32, i32) {
    %c0_i32 = arith.constant 0 : i32
    %c0_i32_0 = arith.constant 0 : i32
    %c0_i32_1 = arith.constant 0 : i32
    return %c0_i32, %c0_i32_0 : i32, i32
  }
  func.func @transform_3(%arg0: i32, %arg1: i32) -> (i32, i32) {
    %c0_i32 = arith.constant 0 : i32
    %c0_i32_0 = arith.constant 0 : i32
    return %arg0, %c0_i32 : i32, i32
  }
  func.func @transform_4(%arg0: i32, %arg1: i32) -> (i32, i32) {
    %c0_i32 = arith.constant 0 : i32
    %c0_i32_0 = arith.constant 0 : i32
    return %arg0, %c0_i32 : i32, i32
  }
}

</mosaic_0001>

<llo_original>
// kernel: tpu_custom_call.1
$region0: #{tpu_custom_call.1}
  #allocation0 [shape = 'u32[]', space=smem, size = 0x4, offset = 0x4, fixed_abs, tag = 'smem constant byte address 0x4 - core index']
  #allocation1 [shape = 'u32[144,128]{1,0:T(1,128)}', space=vmem, size = 0x12000, scoped, tag = 'internal scratch']
  #allocation2 [shape = 'f32[128,128]{1,0:T(8,128)}', space=vmem, size = 0x10000, scoped, tag = 'scratch operand']
  %s0 = inlined_call_operand.vmem [shape: f32[128,128], index: 0, kind: input, shape index: {}]
  %s1 = inlined_call_operand.hbm [shape: f32[128,128], index: 1, kind: input, shape index: {}]
  %s2 = inlined_call_operand.hbm [shape: f32[128,128], index: 2, kind: input, shape index: {}]
  %s3 = inlined_call_operand.vmem [shape: f32[128,1], index: 3, kind: input, shape index: {}]
  %s4 = inlined_call_operand.hbm [shape: f32[128,128], index: 4, kind: output, shape index: {}]
  %s5 = sld [smem:[#allocation0]]
  $region42: #{tpu_custom_call.1} parent=0
    _
  %s7 = ssub.s32 1, %s5
  %s8 = scalar_select 0, %s7, %s5
  $region1: #{tpu_custom_call.1} parent=0
    #allocation3 [shape = 'u8[65536]{0}', space=vmem, size = 0x10000, scoped, tag = 'input window, operand 1, single buffered']
    #allocation4 [shape = 's32[1]{0}', space=sflag, size = 0x4, scoped, tag = 'scoped memory for tpu_custom_call.1']
    #allocation5 [shape = 's32[1]{0}', space=sflag, size = 0x4, scoped, tag = 'scoped memory for tpu_custom_call.1']
    #allocation6 [shape = 'u8[65536]{0}', space=vmem, size = 0x10000, scoped, tag = 'input window, operand 2, single buffered']
    #allocation7 [shape = 's32[1]{0}', space=sflag, size = 0x4, scoped, tag = 'scoped memory for tpu_custom_call.1']
    #allocation8 [shape = 'u8[65536]{0}', space=vmem, size = 0x10000, scoped, tag = 'output window, operand 0, single buffered']
    %9 = vsyncpa [#allocation4], 0
    %10 = vsyncpa [#allocation7], 0
    %11 = vsyncpa [#allocation5], 0
    // Predicated region
    $region2: #{tpu_custom_call.1} parent=1 // pred_check
      _
    $region3: #{tpu_custom_call.1} parent=1 // pred_check_branch
      %13 = sbr.rel (0) target = $region5
    $region4: #{tpu_custom_call.1} parent=1 // pred_region
      _
    $region5: #{tpu_custom_call.1} parent=1 // pred_fallthru
      _
    // Predicated region
    $region6: #{tpu_custom_call.1} parent=1 // pred_check
      _
    $region7: #{tpu_custom_call.1} parent=1 // pred_check_branch
      %15 = sbr.rel (0) target = $region9
    $region8: #{tpu_custom_call.1} parent=1 // pred_region
      %s17 = ssub.s32 2048, 2048
      %18 = vsyncadd [#allocation4], %s17
      %s19 = sshll.u32 [#allocation3], 4
      %s20 = int_to_ptr.vmem [resolvable:$true] %s19
      %25 = dma.hbm_to_vmem [thread:$0]  %s1, 2048, %s20, [#allocation4], 128, 128, 8
    $region9: #{tpu_custom_call.1} parent=1 // pred_fallthru
      _
    // Predicated region
    $region10: #{tpu_custom_call.1} parent=1 // pred_check
      _
    $region11: #{tpu_custom_call.1} parent=1 // pred_check_branch
      %27 = sbr.rel (0) target = $region13
    $region12: #{tpu_custom_call.1} parent=1 // pred_region
      %s29 = ssub.s32 2048, 2048
      %30 = vsyncadd [#allocation7], %s29
      %s31 = sshll.u32 [#allocation6], 4
      %s32 = int_to_ptr.vmem [resolvable:$true] %s31
      %37 = dma.hbm_to_vmem [thread:$0]  %s2, 2048, %s32, [#allocation7], 128, 128, 8
    $region13: #{tpu_custom_call.1} parent=1 // pred_fallthru
      _
    // Predicated region
    $region14: #{tpu_custom_call.1} parent=1 // pred_check
      _
    $region15: #{tpu_custom_call.1} parent=1 // pred_check_branch
      %39 = sbr.rel (0) target = $region17
    $region16: #{tpu_custom_call.1} parent=1 // pred_region
      _
    $region17: #{tpu_custom_call.1} parent=1 // pred_fallthru
      _
    // Predicated region
    $region18: #{tpu_custom_call.1} parent=1 // pred_check
      _
    $region19: #{tpu_custom_call.1} parent=1 // pred_check_branch
      %41 = sbr.rel (0) target = $region21
    $region20: #{tpu_custom_call.1} parent=1 // pred_region
      %42 = dma.done [#allocation4], 2048
    $region21: #{tpu_custom_call.1} parent=1 // pred_fallthru
      _
    // Predicated region
    $region22: #{tpu_custom_call.1} parent=1 // pred_check
      _
    $region23: #{tpu_custom_call.1} parent=1 // pred_check_branch
      %44 = sbr.rel (0) target = $region25
    $region24: #{tpu_custom_call.1} parent=1 // pred_region
      %45 = dma.done [#allocation7], 2048
    $region25: #{tpu_custom_call.1} parent=1 // pred_fallthru
      _
    %p46 = scmp.eq.s32.totalorder 0, 0
    // Predicated region
    $region26: #{tpu_custom_call.1} parent=1 // pred_check
      %p47 = pneg %p46
    $region27: #{tpu_custom_call.1} parent=1 // pred_check_branch
      %49 = sbr.rel (%p47) target = $region29
    $region28: #{tpu_custom_call.1} parent=1 // pred_region
      %50 = vst [vmem:[#allocation2] sm:$0xff] 0.0
      %51 = vst [vmem:[#allocation2 + $0x8] sm:$0xff] 0.0
      %52 = vst [vmem:[#allocation2 + $0x10] sm:$0xff] 0.0
      %53 = vst [vmem:[#allocation2 + $0x18] sm:$0xff] 0.0
      %54 = vst [vmem:[#allocation2 + $0x20] sm:$0xff] 0.0
      %55 = vst [vmem:[#allocation2 + $0x28] sm:$0xff] 0.0
      %56 = vst [vmem:[#allocation2 + $0x30] sm:$0xff] 0.0
      %57 = vst [vmem:[#allocation2 + $0x38] sm:$0xff] 0.0
      %58 = vst [vmem:[#allocation2 + $0x40] sm:$0xff] 0.0
      %59 = vst [vmem:[#allocation2 + $0x48] sm:$0xff] 0.0
      %60 = vst [vmem:[#allocation2 + $0x50] sm:$0xff] 0.0
      %61 = vst [vmem:[#allocation2 + $0x58] sm:$0xff] 0.0
      %62 = vst [vmem:[#allocation2 + $0x60] sm:$0xff] 0.0
      %63 = vst [vmem:[#allocation2 + $0x68] sm:$0xff] 0.0
      %64 = vst [vmem:[#allocation2 + $0x70] sm:$0xff] 0.0
      %65 = vst [vmem:[#allocation2 + $0x78] sm:$0xff] 0.0
    $region29: #{tpu_custom_call.1} parent=1 // pred_fallthru
      _
    %v66 = vld [vmem:[#allocation3] sm:$0xff]
    %v67 = vld [vmem:[#allocation3 + $0x8] sm:$0xff]
    %v68 = vld [vmem:[#allocation3 + $0x10] sm:$0xff]
    %v69 = vld [vmem:[#allocation3 + $0x18] sm:$0xff]
    %v70 = vld [vmem:[#allocation3 + $0x20] sm:$0xff]
    %v71 = vld [vmem:[#allocation3 + $0x28] sm:$0xff]
    %v72 = vld [vmem:[#allocation3 + $0x30] sm:$0xff]
    %v73 = vld [vmem:[#allocation3 + $0x38] sm:$0xff]
    %v74 = vld [vmem:[#allocation3 + $0x40] sm:$0xff]
    %v75 = vld [vmem:[#allocation3 + $0x48] sm:$0xff]
    %v76 = vld [vmem:[#allocation3 + $0x50] sm:$0xff]
    %v77 = vld [vmem:[#allocation3 + $0x58] sm:$0xff]
    %v78 = vld [vmem:[#allocation3 + $0x60] sm:$0xff]
    %v79 = vld [vmem:[#allocation3 + $0x68] sm:$0xff]
    %v80 = vld [vmem:[#allocation3 + $0x70] sm:$0xff]
    %v81 = vld [vmem:[#allocation3 + $0x78] sm:$0xff]
    %v82 = vld [vmem:[#allocation6] sm:$0xff]
    %v83 = vld [vmem:[#allocation6 + $0x8] sm:$0xff]
    %v84 = vld [vmem:[#allocation6 + $0x10] sm:$0xff]
    %v85 = vld [vmem:[#allocation6 + $0x18] sm:$0xff]
    %v86 = vld [vmem:[#allocation6 + $0x20] sm:$0xff]
    %v87 = vld [vmem:[#allocation6 + $0x28] sm:$0xff]
    %v88 = vld [vmem:[#allocation6 + $0x30] sm:$0xff]
    %v89 = vld [vmem:[#allocation6 + $0x38] sm:$0xff]
    %v90 = vld [vmem:[#allocation6 + $0x40] sm:$0xff]
    %v91 = vld [vmem:[#allocation6 + $0x48] sm:$0xff]
    %v92 = vld [vmem:[#allocation6 + $0x50] sm:$0xff]
    %v93 = vld [vmem:[#allocation6 + $0x58] sm:$0xff]
    %v94 = vld [vmem:[#allocation6 + $0x60] sm:$0xff]
    %v95 = vld [vmem:[#allocation6 + $0x68] sm:$0xff]
    %v96 = vld [vmem:[#allocation6 + $0x70] sm:$0xff]
    %v97 = vld [vmem:[#allocation6 + $0x78] sm:$0xff]
    %98 = vmatprep.subr.mxu0 0.0
    %99 = vmatpush1.msra.mxu0 %v82
    %100 = vmatprep.subr.mxu0 0.0
    %101 = vmatpush1.msra.mxu0 %v83
    %102 = vmatprep.subr.mxu0 0.0
    %103 = vmatpush1.msra.mxu0 %v84
    %104 = vmatprep.subr.mxu0 0.0
    %105 = vmatpush1.msra.mxu0 %v85
    %106 = vmatprep.subr.mxu0 0.0
    %107 = vmatpush1.msra.mxu0 %v86
    %108 = vmatprep.subr.mxu0 0.0
    %109 = vmatpush1.msra.mxu0 %v87
    %110 = vmatprep.subr.mxu0 0.0
    %111 = vmatpush1.msra.mxu0 %v88
    %112 = vmatprep.subr.mxu0 0.0
    %113 = vmatpush1.msra.mxu0 %v89
    %114 = vmatprep.subr.mxu0 0.0
    %115 = vmatpush1.msra.mxu0 %v90
    %116 = vmatprep.subr.mxu0 0.0
    %117 = vmatpush1.msra.mxu0 %v91
    %118 = vmatprep.subr.mxu0 0.0
    %119 = vmatpush1.msra.mxu0 %v92
    %120 = vmatprep.subr.mxu0 0.0
    %121 = vmatpush1.msra.mxu0 %v93
    %122 = vmatprep.subr.mxu0 0.0
    %123 = vmatpush1.msra.mxu0 %v94
    %124 = vmatprep.subr.mxu0 0.0
    %125 = vmatpush1.msra.mxu0 %v95
    %126 = vmatprep.subr.mxu0 0.0
    %127 = vmatpush1.msra.mxu0 %v96
    %128 = vmatprep.subr.mxu0 0.0
    %129 = vmatpush1.msra.mxu0 %v97
    %130 = vmatprep.subr.mxu0 0.0
    %131 = vmatpush1.msra.mxu0 0.0
    %132 = vmatprep.subr.mxu0 0.0
    %133 = vmatpush1.msra.mxu0 0.0
    %134 = vmatprep.subr.mxu0 0.0
    %135 = vmatpush1.msra.mxu0 0.0
    %136 = vmatprep.subr.mxu0 0.0
    %137 = vmatpush1.msra.mxu0 0.0
    %138 = vmatprep.subr.mxu0 0.0
    %139 = vmatpush1.msra.mxu0 0.0
    %140 = vmatprep.subr.mxu0 0.0
    %141 = vmatpush1.msra.mxu0 0.0
    %142 = vmatprep.subr.mxu0 0.0
    %143 = vmatpush1.msra.mxu0 0.0
    %144 = vmatprep.subr.mxu0 0.0
    %145 = vmatpush1.msra.mxu0 0.0
    %146 = vmatprep.subr.mxu0 0.0
    %147 = vmatpush1.msra.mxu0 0.0
    %148 = vmatprep.subr.mxu0 0.0
    %149 = vmatpush1.msra.mxu0 0.0
    %150 = vmatprep.subr.mxu0 0.0
    %151 = vmatpush1.msra.mxu0 0.0
    %152 = vmatprep.subr.mxu0 0.0
    %153 = vmatpush1.msra.mxu0 0.0
    %154 = vmatprep.subr.mxu0 0.0
    %155 = vmatpush1.msra.mxu0 0.0
    %156 = vmatprep.subr.mxu0 0.0
    %157 = vmatpush1.msra.mxu0 0.0
    %158 = vmatprep.subr.mxu0 0.0
    %159 = vmatpush1.msra.mxu0 0.0
    %160 = vmatprep.subr.mxu0 0.0
    %161 = vmatpush1.msra.mxu0 0.0
    %162 = vmatprep.mubr.f32.mxu0 0.0
    %163 = vmatmul.mubr.f32.gmra.mrb[0].mxu0 %v66
    %v164 = vpop.f32.mrb[0].mxu0
    %v165 = vadd.f32 0.0, %v164
    %v166 = vpop.f32.mrb[0].mxu0
    %167 = vmatprep.mubr.f32.mxu0 0.0
    %168 = vmatmul.mubr.f32.gmra.mrb[0].mxu0 %v67
    %v169 = vpop.f32.mrb[0].mxu0
    %v170 = vadd.f32 0.0, %v169
    %v171 = vpop.f32.mrb[0].mxu0
    %172 = vmatprep.mubr.f32.mxu0 0.0
    %173 = vmatmul.mubr.f32.gmra.mrb[0].mxu0 %v68
    %v174 = vpop.f32.mrb[0].mxu0
    %v175 = vadd.f32 0.0, %v174
    %v176 = vpop.f32.mrb[0].mxu0
    %177 = vmatprep.mubr.f32.mxu0 0.0
    %178 = vmatmul.mubr.f32.gmra.mrb[0].mxu0 %v69
    %v179 = vpop.f32.mrb[0].mxu0
    %v180 = vadd.f32 0.0, %v179
    %v181 = vpop.f32.mrb[0].mxu0
    %182 = vmatprep.mubr.f32.mxu0 0.0
    %183 = vmatmul.mubr.f32.gmra.mrb[0].mxu0 %v70
    %v184 = vpop.f32.mrb[0].mxu0
    %v185 = vadd.f32 0.0, %v184
    %v186 = vpop.f32.mrb[0].mxu0
    %187 = vmatprep.mubr.f32.mxu0 0.0
    %188 = vmatmul.mubr.f32.gmra.mrb[0].mxu0 %v71
    %v189 = vpop.f32.mrb[0].mxu0
    %v190 = vadd.f32 0.0, %v189
    %v191 = vpop.f32.mrb[0].mxu0
    %192 = vmatprep.mubr.f32.mxu0 0.0
    %193 = vmatmul.mubr.f32.gmra.mrb[0].mxu0 %v72
    %v194 = vpop.f32.mrb[0].mxu0
    %v195 = vadd.f32 0.0, %v194
    %v196 = vpop.f32.mrb[0].mxu0
    %197 = vmatprep.mubr.f32.mxu0 0.0
    %198 = vmatmul.mubr.f32.gmra.mrb[0].mxu0 %v73
    %v199 = vpop.f32.mrb[0].mxu0
    %v200 = vadd.f32 0.0, %v199
    %v201 = vpop.f32.mrb[0].mxu0
    %202 = vmatprep.mubr.f32.mxu0 0.0
    %203 = vmatmul.mubr.f32.gmra.mrb[0].mxu0 %v74
    %v204 = vpop.f32.mrb[0].mxu0
    %v205 = vadd.f32 0.0, %v204
    %v206 = vpop.f32.mrb[0].mxu0
    %207 = vmatprep.mubr.f32.mxu0 0.0
    %208 = vmatmul.mubr.f32.gmra.mrb[0].mxu0 %v75
    %v209 = vpop.f32.mrb[0].mxu0
    %v210 = vadd.f32 0.0, %v209
    %v211 = vpop.f32.mrb[0].mxu0
    %212 = vmatprep.mubr.f32.mxu0 0.0
    %213 = vmatmul.mubr.f32.gmra.mrb[0].mxu0 %v76
    %v214 = vpop.f32.mrb[0].mxu0
    %v215 = vadd.f32 0.0, %v214
    %v216 = vpop.f32.mrb[0].mxu0
    %217 = vmatprep.mubr.f32.mxu0 0.0
    %218 = vmatmul.mubr.f32.gmra.mrb[0].mxu0 %v77
    %v219 = vpop.f32.mrb[0].mxu0
    %v220 = vadd.f32 0.0, %v219
    %v221 = vpop.f32.mrb[0].mxu0
    %222 = vmatprep.mubr.f32.mxu0 0.0
    %223 = vmatmul.mubr.f32.gmra.mrb[0].mxu0 %v78
    %v224 = vpop.f32.mrb[0].mxu0
    %v225 = vadd.f32 0.0, %v224
    %v226 = vpop.f32.mrb[0].mxu0
    %227 = vmatprep.mubr.f32.mxu0 0.0
    %228 = vmatmul.mubr.f32.gmra.mrb[0].mxu0 %v79
    %v229 = vpop.f32.mrb[0].mxu0
    %v230 = vadd.f32 0.0, %v229
    %v231 = vpop.f32.mrb[0].mxu0
    %232 = vmatprep.mubr.f32.mxu0 0.0
    %233 = vmatmul.mubr.f32.gmra.mrb[0].mxu0 %v80
    %v234 = vpop.f32.mrb[0].mxu0
    %v235 = vadd.f32 0.0, %v234
    %v236 = vpop.f32.mrb[0].mxu0
    %237 = vmatprep.mubr.f32.mxu0 0.0
    %238 = vmatmul.mubr.f32.gmra.mrb[0].mxu0 %v81
    %v239 = vpop.f32.mrb[0].mxu0
    %v240 = vadd.f32 0.0, %v239
    %v241 = vpop.f32.mrb[0].mxu0
    %242 = vdwg.mxu0
    %v243 = vld [vmem:[#allocation2] sm:$0xff]
    %v244 = vld [vmem:[#allocation2 + $0x8] sm:$0xff]
    %v245 = vld [vmem:[#allocation2 + $0x10] sm:$0xff]
    %v246 = vld [vmem:[#allocation2 + $0x18] sm:$0xff]
    %v247 = vld [vmem:[#allocation2 + $0x20] sm:$0xff]
    %v248 = vld [vmem:[#allocation2 + $0x28] sm:$0xff]
    %v249 = vld [vmem:[#allocation2 + $0x30] sm:$0xff]
    %v250 = vld [vmem:[#allocation2 + $0x38] sm:$0xff]
    %v251 = vld [vmem:[#allocation2 + $0x40] sm:$0xff]
    %v252 = vld [vmem:[#allocation2 + $0x48] sm:$0xff]
    %v253 = vld [vmem:[#allocation2 + $0x50] sm:$0xff]
    %v254 = vld [vmem:[#allocation2 + $0x58] sm:$0xff]
    %v255 = vld [vmem:[#allocation2 + $0x60] sm:$0xff]
    %v256 = vld [vmem:[#allocation2 + $0x68] sm:$0xff]
    %v257 = vld [vmem:[#allocation2 + $0x70] sm:$0xff]
    %v258 = vld [vmem:[#allocation2 + $0x78] sm:$0xff]
    %v259 = vld [vmem:[%s0] sm:$0xff]
    %v260 = vld [vmem:[%s0 + $0x8] sm:$0xff]
    %v261 = vld [vmem:[%s0 + $0x10] sm:$0xff]
    %v262 = vld [vmem:[%s0 + $0x18] sm:$0xff]
    %v263 = vld [vmem:[%s0 + $0x20] sm:$0xff]
    %v264 = vld [vmem:[%s0 + $0x28] sm:$0xff]
    %v265 = vld [vmem:[%s0 + $0x30] sm:$0xff]
    %v266 = vld [vmem:[%s0 + $0x38] sm:$0xff]
    %v267 = vld [vmem:[%s0 + $0x40] sm:$0xff]
    %v268 = vld [vmem:[%s0 + $0x48] sm:$0xff]
    %v269 = vld [vmem:[%s0 + $0x50] sm:$0xff]
    %v270 = vld [vmem:[%s0 + $0x58] sm:$0xff]
    %v271 = vld [vmem:[%s0 + $0x60] sm:$0xff]
    %v272 = vld [vmem:[%s0 + $0x68] sm:$0xff]
    %v273 = vld [vmem:[%s0 + $0x70] sm:$0xff]
    %v274 = vld [vmem:[%s0 + $0x78] sm:$0xff]
    %275 = vmatprep.subr.mxu0 0.0
    %276 = vmatpush1.msra.mxu0 %v165
    %277 = vmatprep.subr.mxu0 0.0
    %278 = vmatpush1.msra.mxu0 %v170
    %279 = vmatprep.subr.mxu0 0.0
    %280 = vmatpush1.msra.mxu0 %v175
    %281 = vmatprep.subr.mxu0 0.0
    %282 = vmatpush1.msra.mxu0 %v180
    %283 = vmatprep.subr.mxu0 0.0
    %284 = vmatpush1.msra.mxu0 %v185
    %285 = vmatprep.subr.mxu0 0.0
    %286 = vmatpush1.msra.mxu0 %v190
    %287 = vmatprep.subr.mxu0 0.0
    %288 = vmatpush1.msra.mxu0 %v195
    %289 = vmatprep.subr.mxu0 0.0
    %290 = vmatpush1.msra.mxu0 %v200
    %291 = vmatprep.subr.mxu0 0.0
    %292 = vmatpush1.msra.mxu0 %v205
    %293 = vmatprep.subr.mxu0 0.0
    %294 = vmatpush1.msra.mxu0 %v210
    %295 = vmatprep.subr.mxu0 0.0
    %296 = vmatpush1.msra.mxu0 %v215
    %297 = vmatprep.subr.mxu0 0.0
    %298 = vmatpush1.msra.mxu0 %v220
    %299 = vmatprep.subr.mxu0 0.0
    %300 = vmatpush1.msra.mxu0 %v225
    %301 = vmatprep.subr.mxu0 0.0
    %302 = vmatpush1.msra.mxu0 %v230
    %303 = vmatprep.subr.mxu0 0.0
    %304 = vmatpush1.msra.mxu0 %v235
    %305 = vmatprep.subr.mxu0 0.0
    %306 = vmatpush1.msra.mxu0 %v240
    %307 = vmatprep.subr.mxu0 0.0
    %308 = vmatpush1.msra.mxu0 0.0
    %309 = vmatprep.subr.mxu0 0.0
    %310 = vmatpush1.msra.mxu0 0.0
    %311 = vmatprep.subr.mxu0 0.0
    %312 = vmatpush1.msra.mxu0 0.0
    %313 = vmatprep.subr.mxu0 0.0
    %314 = vmatpush1.msra.mxu0 0.0
    %315 = vmatprep.subr.mxu0 0.0
    %316 = vmatpush1.msra.mxu0 0.0
    %317 = vmatprep.subr.mxu0 0.0
    %318 = vmatpush1.msra.mxu0 0.0
    %319 = vmatprep.subr.mxu0 0.0
    %320 = vmatpush1.msra.mxu0 0.0
    %321 = vmatprep.subr.mxu0 0.0
    %322 = vmatpush1.msra.mxu0 0.0
    %323 = vmatprep.subr.mxu0 0.0
    %324 = vmatpush1.msra.mxu0 0.0
    %325 = vmatprep.subr.mxu0 0.0
    %326 = vmatpush1.msra.mxu0 0.0
    %327 = vmatprep.subr.mxu0 0.0
    %328 = vmatpush1.msra.mxu0 0.0
    %329 = vmatprep.subr.mxu0 0.0
    %330 = vmatpush1.msra.mxu0 0.0
    %331 = vmatprep.subr.mxu0 0.0
    %332 = vmatpush1.msra.mxu0 0.0
    %333 = vmatprep.subr.mxu0 0.0
    %334 = vmatpush1.msra.mxu0 0.0
    %335 = vmatprep.subr.mxu0 0.0
    %336 = vmatpush1.msra.mxu0 0.0
    %337 = vmatprep.subr.mxu0 0.0
    %338 = vmatpush1.msra.mxu0 0.0
    %339 = vmatprep.mubr.f32.mxu0 0.0
    %340 = vmatmul.mubr.f32.gmra.mrb[0].mxu0 %v259
    %v341 = vpop.f32.mrb[0].mxu0
    %v342 = vadd.f32 0.0, %v341
    %v343 = vpop.f32.mrb[0].mxu0
    %344 = vmatprep.mubr.f32.mxu0 0.0
    %345 = vmatmul.mubr.f32.gmra.mrb[0].mxu0 %v260
    %v346 = vpop.f32.mrb[0].mxu0
    %v347 = vadd.f32 0.0, %v346
    %v348 = vpop.f32.mrb[0].mxu0
    %349 = vmatprep.mubr.f32.mxu0 0.0
    %350 = vmatmul.mubr.f32.gmra.mrb[0].mxu0 %v261
    %v351 = vpop.f32.mrb[0].mxu0
    %v352 = vadd.f32 0.0, %v351
    %v353 = vpop.f32.mrb[0].mxu0
    %354 = vmatprep.mubr.f32.mxu0 0.0
    %355 = vmatmul.mubr.f32.gmra.mrb[0].mxu0 %v262
    %v356 = vpop.f32.mrb[0].mxu0
    %v357 = vadd.f32 0.0, %v356
    %v358 = vpop.f32.mrb[0].mxu0
    %359 = vmatprep.mubr.f32.mxu0 0.0
    %360 = vmatmul.mubr.f32.gmra.mrb[0].mxu0 %v263
    %v361 = vpop.f32.mrb[0].mxu0
    %v362 = vadd.f32 0.0, %v361
    %v363 = vpop.f32.mrb[0].mxu0
    %364 = vmatprep.mubr.f32.mxu0 0.0
    %365 = vmatmul.mubr.f32.gmra.mrb[0].mxu0 %v264
    %v366 = vpop.f32.mrb[0].mxu0
    %v367 = vadd.f32 0.0, %v366
    %v368 = vpop.f32.mrb[0].mxu0
    %369 = vmatprep.mubr.f32.mxu0 0.0
    %370 = vmatmul.mubr.f32.gmra.mrb[0].mxu0 %v265
    %v371 = vpop.f32.mrb[0].mxu0
    %v372 = vadd.f32 0.0, %v371
    %v373 = vpop.f32.mrb[0].mxu0
    %374 = vmatprep.mubr.f32.mxu0 0.0
    %375 = vmatmul.mubr.f32.gmra.mrb[0].mxu0 %v266
    %v376 = vpop.f32.mrb[0].mxu0
    %v377 = vadd.f32 0.0, %v376
    %v378 = vpop.f32.mrb[0].mxu0
    %379 = vmatprep.mubr.f32.mxu0 0.0
    %380 = vmatmul.mubr.f32.gmra.mrb[0].mxu0 %v267
    %v381 = vpop.f32.mrb[0].mxu0
    %v382 = vadd.f32 0.0, %v381
    %v383 = vpop.f32.mrb[0].mxu0
    %384 = vmatprep.mubr.f32.mxu0 0.0
    %385 = vmatmul.mubr.f32.gmra.mrb[0].mxu0 %v268
    %v386 = vpop.f32.mrb[0].mxu0
    %v387 = vadd.f32 0.0, %v386
    %v388 = vpop.f32.mrb[0].mxu0
    %389 = vmatprep.mubr.f32.mxu0 0.0
    %390 = vmatmul.mubr.f32.gmra.mrb[0].mxu0 %v269
    %v391 = vpop.f32.mrb[0].mxu0
    %v392 = vadd.f32 0.0, %v391
    %v393 = vpop.f32.mrb[0].mxu0
    %394 = vmatprep.mubr.f32.mxu0 0.0
    %395 = vmatmul.mubr.f32.gmra.mrb[0].mxu0 %v270
    %v396 = vpop.f32.mrb[0].mxu0
    %v397 = vadd.f32 0.0, %v396
    %v398 = vpop.f32.mrb[0].mxu0
    %399 = vmatprep.mubr.f32.mxu0 0.0
    %400 = vmatmul.mubr.f32.gmra.mrb[0].mxu0 %v271
    %v401 = vpop.f32.mrb[0].mxu0
    %v402 = vadd.f32 0.0, %v401
    %v403 = vpop.f32.mrb[0].mxu0
    %404 = vmatprep.mubr.f32.mxu0 0.0
    %405 = vmatmul.mubr.f32.gmra.mrb[0].mxu0 %v272
    %v406 = vpop.f32.mrb[0].mxu0
    %v407 = vadd.f32 0.0, %v406
    %v408 = vpop.f32.mrb[0].mxu0
    %409 = vmatprep.mubr.f32.mxu0 0.0
    %410 = vmatmul.mubr.f32.gmra.mrb[0].mxu0 %v273
    %v411 = vpop.f32.mrb[0].mxu0
    %v412 = vadd.f32 0.0, %v411
    %v413 = vpop.f32.mrb[0].mxu0
    %414 = vmatprep.mubr.f32.mxu0 0.0
    %415 = vmatmul.mubr.f32.gmra.mrb[0].mxu0 %v274
    %v416 = vpop.f32.mrb[0].mxu0
    %v417 = vadd.f32 0.0, %v416
    %v418 = vpop.f32.mrb[0].mxu0
    %419 = vdwg.mxu0
    %v420 = vadd.f32 %v243, %v342
    %v421 = vadd.f32 %v244, %v347
    %v422 = vadd.f32 %v245, %v352
    %v423 = vadd.f32 %v246, %v357
    %v424 = vadd.f32 %v247, %v362
    %v425 = vadd.f32 %v248, %v367
    %v426 = vadd.f32 %v249, %v372
    %v427 = vadd.f32 %v250, %v377
    %v428 = vadd.f32 %v251, %v382
    %v429 = vadd.f32 %v252, %v387
    %v430 = vadd.f32 %v253, %v392
    %v431 = vadd.f32 %v254, %v397
    %v432 = vadd.f32 %v255, %v402
    %v433 = vadd.f32 %v256, %v407
    %v434 = vadd.f32 %v257, %v412
    %v435 = vadd.f32 %v258, %v417
    %436 = vst [vmem:[#allocation2] sm:$0xff] %v420
    %437 = vst [vmem:[#allocation2 + $0x8] sm:$0xff] %v421
    %438 = vst [vmem:[#allocation2 + $0x10] sm:$0xff] %v422
    %439 = vst [vmem:[#allocation2 + $0x18] sm:$0xff] %v423
    %440 = vst [vmem:[#allocation2 + $0x20] sm:$0xff] %v424
    %441 = vst [vmem:[#allocation2 + $0x28] sm:$0xff] %v425
    %442 = vst [vmem:[#allocation2 + $0x30] sm:$0xff] %v426
    %443 = vst [vmem:[#allocation2 + $0x38] sm:$0xff] %v427
    %444 = vst [vmem:[#allocation2 + $0x40] sm:$0xff] %v428
    %445 = vst [vmem:[#allocation2 + $0x48] sm:$0xff] %v429
    %446 = vst [vmem:[#allocation2 + $0x50] sm:$0xff] %v430
    %447 = vst [vmem:[#allocation2 + $0x58] sm:$0xff] %v431
    %448 = vst [vmem:[#allocation2 + $0x60] sm:$0xff] %v432
    %449 = vst [vmem:[#allocation2 + $0x68] sm:$0xff] %v433
    %450 = vst [vmem:[#allocation2 + $0x70] sm:$0xff] %v434
    %451 = vst [vmem:[#allocation2 + $0x78] sm:$0xff] %v435
    // Predicated region
    $region30: #{tpu_custom_call.1} parent=1 // pred_check
      %p452 = pneg %p46
    $region31: #{tpu_custom_call.1} parent=1 // pred_check_branch
      %454 = sbr.rel (%p452) target = $region33
    $region32: #{tpu_custom_call.1} parent=1 // pred_region
      %v455 = vld [vmem:[%s3] sm:$0xff]
      %v456 = vld [vmem:[%s3 + $0x8] sm:$0xff]
      %v457 = vld [vmem:[%s3 + $0x10] sm:$0xff]
      %v458 = vld [vmem:[%s3 + $0x18] sm:$0xff]
      %v459 = vld [vmem:[%s3 + $0x20] sm:$0xff]
      %v460 = vld [vmem:[%s3 + $0x28] sm:$0xff]
      %v461 = vld [vmem:[%s3 + $0x30] sm:$0xff]
      %v462 = vld [vmem:[%s3 + $0x38] sm:$0xff]
      %v463 = vld [vmem:[%s3 + $0x40] sm:$0xff]
      %v464 = vld [vmem:[%s3 + $0x48] sm:$0xff]
      %v465 = vld [vmem:[%s3 + $0x50] sm:$0xff]
      %v466 = vld [vmem:[%s3 + $0x58] sm:$0xff]
      %v467 = vld [vmem:[%s3 + $0x60] sm:$0xff]
      %v468 = vld [vmem:[%s3 + $0x68] sm:$0xff]
      %v469 = vld [vmem:[%s3 + $0x70] sm:$0xff]
      %v470 = vld [vmem:[%s3 + $0x78] sm:$0xff]
      %v471 = vld [vmem:[#allocation2] sm:$0xff]
      %v472 = vld [vmem:[#allocation2 + $0x8] sm:$0xff]
      %v473 = vld [vmem:[#allocation2 + $0x10] sm:$0xff]
      %v474 = vld [vmem:[#allocation2 + $0x18] sm:$0xff]
      %v475 = vld [vmem:[#allocation2 + $0x20] sm:$0xff]
      %v476 = vld [vmem:[#allocation2 + $0x28] sm:$0xff]
      %v477 = vld [vmem:[#allocation2 + $0x30] sm:$0xff]
      %v478 = vld [vmem:[#allocation2 + $0x38] sm:$0xff]
      %v479 = vld [vmem:[#allocation2 + $0x40] sm:$0xff]
      %v480 = vld [vmem:[#allocation2 + $0x48] sm:$0xff]
      %v481 = vld [vmem:[#allocation2 + $0x50] sm:$0xff]
      %v482 = vld [vmem:[#allocation2 + $0x58] sm:$0xff]
      %v483 = vld [vmem:[#allocation2 + $0x60] sm:$0xff]
      %v484 = vld [vmem:[#allocation2 + $0x68] sm:$0xff]
      %v485 = vld [vmem:[#allocation2 + $0x70] sm:$0xff]
      %v486 = vld [vmem:[#allocation2 + $0x78] sm:$0xff]
      %488 = vset.pattern.permute.xlu0 0
      %489 = vperm.xlu0 %488, %v455
      %v490 = vpop.permute.xlu0 %489
      %493 = vset.pattern.permute.xlu0 0
      %494 = vperm.xlu0 %493, %v456
      %v495 = vpop.permute.xlu0 %494
      %498 = vset.pattern.permute.xlu0 0
      %499 = vperm.xlu0 %498, %v457
      %v500 = vpop.permute.xlu0 %499
      %503 = vset.pattern.permute.xlu0 0
      %504 = vperm.xlu0 %503, %v458
      %v505 = vpop.permute.xlu0 %504
      %508 = vset.pattern.permute.xlu0 0
      %509 = vperm.xlu0 %508, %v459
      %v510 = vpop.permute.xlu0 %509
      %513 = vset.pattern.permute.xlu0 0
      %514 = vperm.xlu0 %513, %v460
      %v515 = vpop.permute.xlu0 %514
      %518 = vset.pattern.permute.xlu0 0
      %519 = vperm.xlu0 %518, %v461
      %v520 = vpop.permute.xlu0 %519
      %523 = vset.pattern.permute.xlu0 0
      %524 = vperm.xlu0 %523, %v462
      %v525 = vpop.permute.xlu0 %524
      %528 = vset.pattern.permute.xlu0 0
      %529 = vperm.xlu0 %528, %v463
      %v530 = vpop.permute.xlu0 %529
      %533 = vset.pattern.permute.xlu0 0
      %534 = vperm.xlu0 %533, %v464
      %v535 = vpop.permute.xlu0 %534
      %538 = vset.pattern.permute.xlu0 0
      %539 = vperm.xlu0 %538, %v465
      %v540 = vpop.permute.xlu0 %539
      %543 = vset.pattern.permute.xlu0 0
      %544 = vperm.xlu0 %543, %v466
      %v545 = vpop.permute.xlu0 %544
      %548 = vset.pattern.permute.xlu0 0
      %549 = vperm.xlu0 %548, %v467
      %v550 = vpop.permute.xlu0 %549
      %553 = vset.pattern.permute.xlu0 0
      %554 = vperm.xlu0 %553, %v468
      %v555 = vpop.permute.xlu0 %554
      %558 = vset.pattern.permute.xlu0 0
      %559 = vperm.xlu0 %558, %v469
      %v560 = vpop.permute.xlu0 %559
      %563 = vset.pattern.permute.xlu0 0
      %564 = vperm.xlu0 %563, %v470
      %v565 = vpop.permute.xlu0 %564
      %v567 = vmul.f32 %v490, %v471
      %v568 = vmul.f32 %v495, %v472
      %v569 = vmul.f32 %v500, %v473
      %v570 = vmul.f32 %v505, %v474
      %v571 = vmul.f32 %v510, %v475
      %v572 = vmul.f32 %v515, %v476
      %v573 = vmul.f32 %v520, %v477
      %v574 = vmul.f32 %v525, %v478
      %v575 = vmul.f32 %v530, %v479
      %v576 = vmul.f32 %v535, %v480
      %v577 = vmul.f32 %v540, %v481
      %v578 = vmul.f32 %v545, %v482
      %v579 = vmul.f32 %v550, %v483
      %v580 = vmul.f32 %v555, %v484
      %v581 = vmul.f32 %v560, %v485
      %v582 = vmul.f32 %v565, %v486
      %583 = vst [vmem:[#allocation8] sm:$0xff] %v567
      %584 = vst [vmem:[#allocation8 + $0x8] sm:$0xff] %v568
      %585 = vst [vmem:[#allocation8 + $0x10] sm:$0xff] %v569
      %586 = vst [vmem:[#allocation8 + $0x18] sm:$0xff] %v570
      %587 = vst [vmem:[#allocation8 + $0x20] sm:$0xff] %v571
      %588 = vst [vmem:[#allocation8 + $0x28] sm:$0xff] %v572
      %589 = vst [vmem:[#allocation8 + $0x30] sm:$0xff] %v573
      %590 = vst [vmem:[#allocation8 + $0x38] sm:$0xff] %v574
      %591 = vst [vmem:[#allocation8 + $0x40] sm:$0xff] %v575
      %592 = vst [vmem:[#allocation8 + $0x48] sm:$0xff] %v576
      %593 = vst [vmem:[#allocation8 + $0x50] sm:$0xff] %v577
      %594 = vst [vmem:[#allocation8 + $0x58] sm:$0xff] %v578
      %595 = vst [vmem:[#allocation8 + $0x60] sm:$0xff] %v579
      %596 = vst [vmem:[#allocation8 + $0x68] sm:$0xff] %v580
      %597 = vst [vmem:[#allocation8 + $0x70] sm:$0xff] %v581
      %598 = vst [vmem:[#allocation8 + $0x78] sm:$0xff] %v582
    $region33: #{tpu_custom_call.1} parent=1 // pred_fallthru
      _
    // Predicated region
    $region34: #{tpu_custom_call.1} parent=1 // pred_check
      _
    $region35: #{tpu_custom_call.1} parent=1 // pred_check_branch
      %600 = sbr.rel (0) target = $region37
    $region36: #{tpu_custom_call.1} parent=1 // pred_region
      %s602 = ssub.s32 2048, 2048
      %603 = vsyncadd [#allocation5], %s602
      %s604 = sshll.u32 [#allocation8], 4
      %s605 = int_to_ptr.vmem [resolvable:$true] %s604
      %610 = dma.vmem_to_hbm [thread:$0]  %s605, 2048, %s4, [#allocation5], 128, 128, 8
    $region37: #{tpu_custom_call.1} parent=1 // pred_fallthru
      _
    // Predicated region
    $region38: #{tpu_custom_call.1} parent=1 // pred_check
      _
    $region39: #{tpu_custom_call.1} parent=1 // pred_check_branch
      %612 = sbr.rel (0) target = $region41
    $region40: #{tpu_custom_call.1} parent=1 // pred_region
      %613 = dma.done [#allocation5], 2048
    $region41: #{tpu_custom_call.1} parent=1 // pred_fallthru
      _
    %614 = vsyncpa [#allocation4], 1
    %615 = vsyncpa [#allocation7], 1
    %616 = vsyncpa [#allocation5], 1

</llo_original>
